<compile_context>
chip_gen: v5e
topology: v5e:2x2
jax: 0.10.0
libtpu: 0.0.40
codegen_flags: <defaults>
</compile_context>

<pallas_src>
import math

import jax
import jax.numpy as jnp
import numpy as np
from jax.experimental import pallas as pl
from jax.experimental.pallas import tpu as pltpu

_TWO_PI = 6.283185307179586
# Odd Taylor coefficients for sin(theta), |theta| <= pi/2 (max err ~6e-8).
_S3, _S5, _S7 = -1.0 / 6.0, 1.0 / 120.0, -1.0 / 5040.0
_S9, _S11 = 1.0 / 362880.0, -1.0 / 39916800.0


def _round_up(v, m):
    return ((v + m - 1) // m) * m


def _sin_two_pi(u):
    """sin(2*pi*u) via exact-period range reduction (u in 'turns')."""
    r = u - jnp.round(u)                      # r in [-0.5, 0.5]
    k = jnp.round(2.0 * r)                    # nearest half turn: {-1, 0, +1}
    p = r - 0.5 * k                           # p in [-0.25, 0.25]
    th = _TWO_PI * p                          # theta in [-pi/2, pi/2]
    t2 = th * th
    s = th * (1.0 + t2 * (_S3 + t2 * (_S5 + t2 * (_S7 + t2 * (_S9 + t2 * _S11)))))
    return (1.0 - 2.0 * k * k) * s            # multiply by cos(pi*k) sign


def _make_kernel(in_features, out_features, use_mxu):
    if use_mxu:
        def kernel(x_ref, mt_ref, bt_ref, o_ref):
            # K >= 16: feed the MXU (its VLIW slot is otherwise idle while the
            # VALU carries the sin polynomial).  Request full f32 precision —
            # the integer frequencies must not be squashed to a bf16 pass.
            t = jnp.dot(x_ref[...], mt_ref[...],
                        preferred_element_type=jnp.float32,
                        precision=jax.lax.Precision.HIGHEST)
            o_ref[...] = _sin_two_pi(t + bt_ref[...]).astype(o_ref.dtype)
    else:
        def kernel(x_ref, mt_ref, bt_ref, o_ref):
            # Tiny K (< 16): short, statically unrolled VPU broadcast-MAC.
            x = x_ref[...]                    # [tile, K]
            mt = mt_ref[...]                  # [K, F]
            tm = x.shape[0]
            # Bias (in turns) folded into the accumulator; broadcast hoisted
            # out of the loop.
            acc = jnp.broadcast_to(bt_ref[...], (tm, out_features))
            for k in range(in_features):
                acc = acc + x[:, k:k + 1] * mt[k:k + 1, :]
            o_ref[...] = _sin_two_pi(acc).astype(o_ref.dtype)
    return kernel


def prepare_fourier_params(weight, bias):
    """One-time parameter prep (host side, NOT the per-call hot path).

    weight: [out_features, in_features] (nn.Linear convention); entries are
            integer multiples of 2*pi by the FourierLayer construction.
    bias:   [out_features]
    Returns (M^T [K, F] f32 with exact integer entries, bias/(2*pi) [1, F]).
    """
    w = np.asarray(weight, np.float64)
    m = np.round(w / (2.0 * np.pi))
    dev = float(np.max(np.abs(w - m * (2.0 * np.pi)))) if w.size else 0.0
    assert dev < 1e-3, (
        "FourierLayer weights must be integer multiples of 2*pi for the "
        f"exact-period range reduction (max deviation {dev})")
    mt = jnp.asarray(m.T, jnp.float32)                               # [K, F]
    bt = jnp.asarray(np.asarray(bias, np.float64)[None, :] / (2.0 * np.pi),
                     jnp.float32)                                    # [1, F]
    return mt, bt


def _pick_row_tile(n, tile_n):
    """Row tile (multiple of 8) and grid steps; >=2 steps once n >= 16 so the
    v7x dual TensorCores both get a slice of the 'parallel' axis."""
    if n < 8:
        return n, 1                            # single block == full (tiny) dim
    tile = min(tile_n, (n // 8) * 8)
    steps = pl.cdiv(n, tile)
    if n >= 16 and steps < 2:
        steps = 2
    tile = min(tile, _round_up(pl.cdiv(n, steps), 8))
    return tile, pl.cdiv(n, tile)


def fourier_layer(x, mt, bt, *, tile_n=512):
    """sin(x @ W.T + b) with W = 2*pi*mt.T, b = 2*pi*bt (from prepare_fourier_params).

    x: [N, in_features] float32.  Returns [N, out_features] float32.
    """
    n, in_features = x.shape
    k2, out_features = mt.shape
    assert k2 == in_features, (mt.shape, x.shape)

    tile, steps = _pick_row_tile(n, tile_n)
    use_mxu = in_features >= 16
    kernel = _make_kernel(in_features, out_features, use_mxu)

    # Consistent with actual HBM traffic (no padded columns / extra passes).
    cost = pl.CostEstimate(
        flops=(2 * in_features + 30) * n * out_features,
        transcendentals=0,
        bytes_accessed=4 * (n * in_features + in_features * out_features
                            + out_features + n * out_features),
    )

    # Double-buffered x / out tiles + grid-invariant weights & bias (+slack).
    need = 4 * (2 * tile * in_features + 2 * tile * out_features
                + 2 * in_features * out_features + 2 * out_features)
    vmem_limit = int(min(64 << 20, max(2 * need + (4 << 20), 32 << 20)))

    return pl.pallas_call(
        kernel,
        out_shape=jax.ShapeDtypeStruct((n, out_features), x.dtype),
        grid_spec=pltpu.PrefetchScalarGridSpec(
            num_scalar_prefetch=0,
            grid=(steps,),
            in_specs=[
                pl.BlockSpec((tile, in_features), lambda i: (i, 0)),
                pl.BlockSpec((in_features, out_features), lambda i: (0, 0)),
                pl.BlockSpec((1, out_features), lambda i: (0, 0)),
            ],
            out_specs=pl.BlockSpec((tile, out_features), lambda i: (i, 0)),
        ),
        compiler_params=pltpu.CompilerParams(
            dimension_semantics=("parallel",),
            vmem_limit_bytes=vmem_limit),
        cost_estimate=cost,
    )(x, mt, bt)


def init_fourier_params(key, in_features, out_features, weight_scale,
                        quantization_interval=2 * np.pi):
    """Deterministic replication of FourierLayer.__init__ weight/bias init."""
    for s in weight_scale:
        r = 2 * s / quantization_interval
        assert math.isclose(r, round(r)), \
            "weight_scale should be divisible by quantization interval"
    k_w, k_b = jax.random.split(key)
    col_keys = jax.random.split(k_w, in_features)
    cols = []
    for i in range(in_features):
        n_levels = int(2 * weight_scale[i] / quantization_interval) + 1
        init = jax.random.randint(col_keys[i], (out_features,), 0, n_levels)
        cols.append(init.astype(jnp.float32) * quantization_interval
                    - weight_scale[i])
    weight = jnp.stack(cols, axis=1)            # [out_features, in_features]
    bias = jax.random.uniform(k_b, (out_features,), minval=-np.pi,
                              maxval=np.pi, dtype=jnp.float32)
    return weight, bias


if __name__ == "__main__":
    key = jax.random.PRNGKey(0)

    def run_case(case_key, n, in_features, out_features):
        k_params, k_x = jax.random.split(case_key)
        weight_scale = [16.0 * np.pi] * in_features      # multiples of 2*pi
        weight, bias = init_fourier_params(
            k_params, in_features, out_features, weight_scale)
        mt, bt = prepare_fourier_params(weight, bias)    # one-time prep
        x = jax.random.uniform(k_x, (n, in_features), minval=-1.0, maxval=1.0,
                               dtype=jnp.float32)

        out = jax.block_until_ready(fourier_layer(x, mt, bt))

        # Float64 reference using the stored f32 weights.  The kernel's
        # exact-period range reduction is at least as accurate as a naive f32
        # sin(x @ W.T + b) (whose argument alone carries ~1e-4 rounding at
        # |z| ~ 16*pi*K), so 3e-4 absolute tolerance is comfortable.
        ref = np.sin(np.asarray(x, np.float64) @ np.asarray(weight, np.float64).T
                     + np.asarray(bias, np.float64))
        np.testing.assert_allclose(np.asarray(out, np.float64), ref,
                                   rtol=0.0, atol=3e-4)

    k1, k2 = jax.random.split(key)
    run_case(k1, n=128, in_features=8, out_features=32)   # demo shape
    run_case(k2, n=300, in_features=8, out_features=48)   # ragged row grid
    print("KERNEL_OK")
</pallas_src>

<mosaic_0001>
module attributes {stable_mosaic.version = 11 : i64} {
  func.func @kernel(%arg0: i32, %arg1: memref<64x8xf32, #tpu.memory_space<vmem>>, %arg2: memref<8x32xf32, #tpu.memory_space<vmem>>, %arg3: memref<1x32xf32, #tpu.memory_space<vmem>>, %arg4: memref<64x32xf32, #tpu.memory_space<vmem>>) attributes {dimension_semantics = [#tpu.dimension_semantics<parallel>], iteration_bounds = array<i64: 2>, scalar_prefetch = 0 : i64, scratch_operands = 0 : i64, tpu.core_type = #tpu.core_type<tc>, window_params = [{transform_indices = @transform_0, window_bounds = array<i64: 64, 8>}, {pipeline_mode = #tpu.pipeline_mode<synchronous>, transform_indices = @transform_1, window_bounds = array<i64: 8, 32>}, {pipeline_mode = #tpu.pipeline_mode<synchronous>, transform_indices = @transform_2, window_bounds = array<i64: 1, 32>}, {transform_indices = @transform_3, window_bounds = array<i64: 64, 32>}]} {
    %c0 = arith.constant 0 : index
    %c0_0 = arith.constant 0 : index
    %0 = vector.load %arg1[%c0, %c0_0] : memref<64x8xf32, #tpu.memory_space<vmem>>, vector<64x8xf32>
    %c0_1 = arith.constant 0 : index
    %c0_2 = arith.constant 0 : index
    %1 = vector.load %arg2[%c0_1, %c0_2] : memref<8x32xf32, #tpu.memory_space<vmem>>, vector<8x32xf32>
    %c0_3 = arith.constant 0 : index
    %c0_4 = arith.constant 0 : index
    %2 = vector.load %arg3[%c0_3, %c0_4] : memref<1x32xf32, #tpu.memory_space<vmem>>, vector<1x32xf32>
    %3 = vector.shape_cast %2 : vector<1x32xf32> to vector<1x32xf32>
    %4 = vector.broadcast %3 : vector<1x32xf32> to vector<64x32xf32>
    %5 = vector.extract_strided_slice %0 {offsets = [0, 0], sizes = [64, 1], strides = [1, 1]} : vector<64x8xf32> to vector<64x1xf32>
    %6 = vector.extract_strided_slice %1 {offsets = [0, 0], sizes = [1, 32], strides = [1, 1]} : vector<8x32xf32> to vector<1x32xf32>
    %7 = vector.broadcast %5 : vector<64x1xf32> to vector<64x32xf32>
    %8 = vector.broadcast %6 : vector<1x32xf32> to vector<64x32xf32>
    %9 = arith.mulf %7, %8 : vector<64x32xf32>
    %10 = arith.addf %4, %9 : vector<64x32xf32>
    %11 = vector.extract_strided_slice %0 {offsets = [0, 1], sizes = [64, 1], strides = [1, 1]} : vector<64x8xf32> to vector<64x1xf32>
    %12 = vector.extract_strided_slice %1 {offsets = [1, 0], sizes = [1, 32], strides = [1, 1]} : vector<8x32xf32> to vector<1x32xf32>
    %13 = vector.broadcast %11 : vector<64x1xf32> to vector<64x32xf32>
    %14 = vector.broadcast %12 : vector<1x32xf32> to vector<64x32xf32>
    %15 = arith.mulf %13, %14 : vector<64x32xf32>
    %16 = arith.addf %10, %15 : vector<64x32xf32>
    %17 = vector.extract_strided_slice %0 {offsets = [0, 2], sizes = [64, 1], strides = [1, 1]} : vector<64x8xf32> to vector<64x1xf32>
    %18 = vector.extract_strided_slice %1 {offsets = [2, 0], sizes = [1, 32], strides = [1, 1]} : vector<8x32xf32> to vector<1x32xf32>
    %19 = vector.broadcast %17 : vector<64x1xf32> to vector<64x32xf32>
    %20 = vector.broadcast %18 : vector<1x32xf32> to vector<64x32xf32>
    %21 = arith.mulf %19, %20 : vector<64x32xf32>
    %22 = arith.addf %16, %21 : vector<64x32xf32>
    %23 = vector.extract_strided_slice %0 {offsets = [0, 3], sizes = [64, 1], strides = [1, 1]} : vector<64x8xf32> to vector<64x1xf32>
    %24 = vector.extract_strided_slice %1 {offsets = [3, 0], sizes = [1, 32], strides = [1, 1]} : vector<8x32xf32> to vector<1x32xf32>
    %25 = vector.broadcast %23 : vector<64x1xf32> to vector<64x32xf32>
    %26 = vector.broadcast %24 : vector<1x32xf32> to vector<64x32xf32>
    %27 = arith.mulf %25, %26 : vector<64x32xf32>
    %28 = arith.addf %22, %27 : vector<64x32xf32>
    %29 = vector.extract_strided_slice %0 {offsets = [0, 4], sizes = [64, 1], strides = [1, 1]} : vector<64x8xf32> to vector<64x1xf32>
    %30 = vector.extract_strided_slice %1 {offsets = [4, 0], sizes = [1, 32], strides = [1, 1]} : vector<8x32xf32> to vector<1x32xf32>
    %31 = vector.broadcast %29 : vector<64x1xf32> to vector<64x32xf32>
    %32 = vector.broadcast %30 : vector<1x32xf32> to vector<64x32xf32>
    %33 = arith.mulf %31, %32 : vector<64x32xf32>
    %34 = arith.addf %28, %33 : vector<64x32xf32>
    %35 = vector.extract_strided_slice %0 {offsets = [0, 5], sizes = [64, 1], strides = [1, 1]} : vector<64x8xf32> to vector<64x1xf32>
    %36 = vector.extract_strided_slice %1 {offsets = [5, 0], sizes = [1, 32], strides = [1, 1]} : vector<8x32xf32> to vector<1x32xf32>
    %37 = vector.broadcast %35 : vector<64x1xf32> to vector<64x32xf32>
    %38 = vector.broadcast %36 : vector<1x32xf32> to vector<64x32xf32>
    %39 = arith.mulf %37, %38 : vector<64x32xf32>
    %40 = arith.addf %34, %39 : vector<64x32xf32>
    %41 = vector.extract_strided_slice %0 {offsets = [0, 6], sizes = [64, 1], strides = [1, 1]} : vector<64x8xf32> to vector<64x1xf32>
    %42 = vector.extract_strided_slice %1 {offsets = [6, 0], sizes = [1, 32], strides = [1, 1]} : vector<8x32xf32> to vector<1x32xf32>
    %43 = vector.broadcast %41 : vector<64x1xf32> to vector<64x32xf32>
    %44 = vector.broadcast %42 : vector<1x32xf32> to vector<64x32xf32>
    %45 = arith.mulf %43, %44 : vector<64x32xf32>
    %46 = arith.addf %40, %45 : vector<64x32xf32>
    %47 = vector.extract_strided_slice %0 {offsets = [0, 7], sizes = [64, 1], strides = [1, 1]} : vector<64x8xf32> to vector<64x1xf32>
    %48 = vector.extract_strided_slice %1 {offsets = [7, 0], sizes = [1, 32], strides = [1, 1]} : vector<8x32xf32> to vector<1x32xf32>
    %49 = vector.broadcast %47 : vector<64x1xf32> to vector<64x32xf32>
    %50 = vector.broadcast %48 : vector<1x32xf32> to vector<64x32xf32>
    %51 = arith.mulf %49, %50 : vector<64x32xf32>
    %52 = arith.addf %46, %51 : vector<64x32xf32>
    %53 = math.roundeven %52 : vector<64x32xf32>
    %54 = arith.subf %52, %53 : vector<64x32xf32>
    %cst = arith.constant 2.000000e+00 : f32
    %55 = vector.broadcast %cst : f32 to vector<64x32xf32>
    %56 = arith.mulf %55, %54 : vector<64x32xf32>
    %57 = math.roundeven %56 : vector<64x32xf32>
    %cst_5 = arith.constant 5.000000e-01 : f32
    %58 = vector.broadcast %cst_5 : f32 to vector<64x32xf32>
    %59 = arith.mulf %58, %57 : vector<64x32xf32>
    %60 = arith.subf %54, %59 : vector<64x32xf32>
    %cst_6 = arith.constant 6.28318548 : f32
    %61 = vector.broadcast %cst_6 : f32 to vector<64x32xf32>
    %62 = arith.mulf %61, %60 : vector<64x32xf32>
    %63 = arith.mulf %62, %62 : vector<64x32xf32>
    %cst_7 = arith.constant -2.50521079E-8 : f32
    %64 = vector.broadcast %cst_7 : f32 to vector<64x32xf32>
    %65 = arith.mulf %63, %64 : vector<64x32xf32>
    %cst_8 = arith.constant 2.75573188E-6 : f32
    %66 = vector.broadcast %cst_8 : f32 to vector<64x32xf32>
    %67 = arith.addf %66, %65 : vector<64x32xf32>
    %68 = arith.mulf %63, %67 : vector<64x32xf32>
    %cst_9 = arith.constant -1.98412701E-4 : f32
    %69 = vector.broadcast %cst_9 : f32 to vector<64x32xf32>
    %70 = arith.addf %69, %68 : vector<64x32xf32>
    %71 = arith.mulf %63, %70 : vector<64x32xf32>
    %cst_10 = arith.constant 0.00833333377 : f32
    %72 = vector.broadcast %cst_10 : f32 to vector<64x32xf32>
    %73 = arith.addf %72, %71 : vector<64x32xf32>
    %74 = arith.mulf %63, %73 : vector<64x32xf32>
    %cst_11 = arith.constant -0.166666672 : f32
    %75 = vector.broadcast %cst_11 : f32 to vector<64x32xf32>
    %76 = arith.addf %75, %74 : vector<64x32xf32>
    %77 = arith.mulf %63, %76 : vector<64x32xf32>
    %cst_12 = arith.constant 1.000000e+00 : f32
    %78 = vector.broadcast %cst_12 : f32 to vector<64x32xf32>
    %79 = arith.addf %78, %77 : vector<64x32xf32>
    %80 = arith.mulf %62, %79 : vector<64x32xf32>
    %cst_13 = arith.constant 2.000000e+00 : f32
    %81 = vector.broadcast %cst_13 : f32 to vector<64x32xf32>
    %82 = arith.mulf %81, %57 : vector<64x32xf32>
    %83 = arith.mulf %82, %57 : vector<64x32xf32>
    %cst_14 = arith.constant 1.000000e+00 : f32
    %84 = vector.broadcast %cst_14 : f32 to vector<64x32xf32>
    %85 = arith.subf %84, %83 : vector<64x32xf32>
    %86 = arith.mulf %85, %80 : vector<64x32xf32>
    %c0_15 = arith.constant 0 : index
    %c0_16 = arith.constant 0 : index
    %87 = vector.load %arg4[%c0_15, %c0_16] : memref<64x32xf32, #tpu.memory_space<vmem>>, vector<64x32xf32>
    tpu.vector_store %arg4[%c0_15, %c0_16], %86 {strides = array<i32>} : memref<64x32xf32, #tpu.memory_space<vmem>>, vector<64x32xf32>,
    return
  }
  func.func @transform_0(%arg0: i32) -> (i32, i32) {
    %c0_i32 = arith.constant 0 : i32
    %c0_i32_0 = arith.constant 0 : i32
    return %arg0, %c0_i32 : i32, i32
  }
  func.func @transform_1(%arg0: i32) -> (i32, i32) {
    %c0_i32 = arith.constant 0 : i32
    %c0_i32_0 = arith.constant 0 : i32
    %c0_i32_1 = arith.constant 0 : i32
    return %c0_i32, %c0_i32_0 : i32, i32
  }
  func.func @transform_2(%arg0: i32) -> (i32, i32) {
    %c0_i32 = arith.constant 0 : i32
    %c0_i32_0 = arith.constant 0 : i32
    %c0_i32_1 = arith.constant 0 : i32
    return %c0_i32, %c0_i32_0 : i32, i32
  }
  func.func @transform_3(%arg0: i32) -> (i32, i32) {
    %c0_i32 = arith.constant 0 : i32
    %c0_i32_0 = arith.constant 0 : i32
    return %arg0, %c0_i32 : i32, i32
  }
}

</mosaic_0001>

<llo_original>
// kernel: tpu_custom_call.1
$region0: #{tpu_custom_call.1}
  #allocation0 [shape = 'u32[]', space=smem, size = 0x4, offset = 0x4, fixed_abs, tag = 'smem constant byte address 0x4 - core index']
  #allocation1 [shape = 'u32[72,128]{1,0:T(1,128)}', space=vmem, size = 0x9000, scoped, tag = 'internal scratch']
  %s0 = inlined_call_operand.vmem [shape: f32[128,8], index: 0, kind: input, shape index: {}]
  %s1 = inlined_call_operand.vmem [shape: f32[8,32], index: 1, kind: input, shape index: {}]
  %s2 = inlined_call_operand.vmem [shape: f32[1,32], index: 2, kind: input, shape index: {}]
  %s3 = inlined_call_operand.vmem [shape: f32[128,32], index: 3, kind: output, shape index: {}]
  %s4 = sld [smem:[#allocation0]]
  $region45: #{tpu_custom_call.1} parent=0
    _
  %s6 = ssub.s32 1, %s4
  %s7 = scalar_select 0, %s6, %s4
  loop: start=0, step=1, limit=4
  $region2: #{tpu_custom_call.1} parent=0 // loop_pre_header
    _
  $region3: #{tpu_custom_call.1} parent=0 // loop_header
    %s9 = sphi 0, %s13
    %p10 = scmp.ge.s32.totalorder %s9, 4
    %s19 = sphi 0, %s21
    %s22 = sphi 0, %s19
    %s23 = sphi 0, %s22
    %s39 = sphi 0, %s23
    %s43 = sphi 0, %s43
    %s45 = sphi 0, %s43
    %s46 = sphi 0, %s45
    %s60 = sphi 0, %s46
    %s64 = sphi 0, %s64
    %s66 = sphi 0, %s64
    %s67 = sphi 0, %s66
    %s81 = sphi 0, %s67
    %s87 = sphi 0, %s89
    %s90 = sphi 0, %s87
    %s91 = sphi 0, %s90
    %s107 = sphi 0, %s91
  $region4: #{tpu_custom_call.1} parent=0 // loop_header_branch
    %12 = sbr.rel (%p10) target = $region8
  $region5: #{tpu_custom_call.1} parent=0 // loop_body
    %s14 = ssub.s32 %s9, 1
    %s15 = ssub.s32 %s9, 2
    %s16 = sadd.s32 %s9, 1
    %s17 = ssub.s32 %s9, %s16
    %p18 = scmp.eq.s32.totalorder %s17, 0
    %s20 = sadd.s32 %s19, 1
    %s21 = scalar_select %p18, %s19, %s20
    %p24 = pneg %p18
    %p25 = scmp.eq.s32.totalorder %s9, 1
    %p26 = por %p24, %p25
    %p27 = scmp.ne.s32.totalorder %s19, %s22
    %p28 = scmp.eq.s32.totalorder %s9, 0
    %p29 = por %p27, %p28
    %p30 = scmp.ne.s32.totalorder %s19, %s22
    %p31 = scmp.eq.s32.totalorder %s14, 1
    %p32 = por %p30, %p31
    %p33 = scmp.ne.s32.totalorder %s22, %s23
    %p34 = scmp.eq.s32.totalorder %s14, 0
    %p35 = por %p33, %p34
    %p36 = scmp.ne.s32.totalorder %s22, %s23
    %p37 = scmp.eq.s32.totalorder %s15, 1
    %p38 = por %p36, %p37
    %p40 = scmp.ne.s32.totalorder %s23, %s39
    %p41 = scmp.eq.s32.totalorder %s15, 0
    %p42 = por %p40, %p41
    %s44 = sadd.s32 %s43, 1
    %p47 = scmp.eq.s32.totalorder %s9, 1
    %p48 = scmp.ne.s32.totalorder %s43, %s45
    %p49 = scmp.eq.s32.totalorder %s9, 0
    %p50 = por %p48, %p49
    %p51 = scmp.ne.s32.totalorder %s43, %s45
    %p52 = scmp.eq.s32.totalorder %s14, 1
    %p53 = por %p51, %p52
    %p54 = scmp.ne.s32.totalorder %s45, %s46
    %p55 = scmp.eq.s32.totalorder %s14, 0
    %p56 = por %p54, %p55
    %p57 = scmp.ne.s32.totalorder %s45, %s46
    %p58 = scmp.eq.s32.totalorder %s15, 1
    %p59 = por %p57, %p58
    %p61 = scmp.ne.s32.totalorder %s46, %s60
    %p62 = scmp.eq.s32.totalorder %s15, 0
    %p63 = por %p61, %p62
    %s65 = sadd.s32 %s64, 1
    %p68 = scmp.eq.s32.totalorder %s9, 1
    %p69 = scmp.ne.s32.totalorder %s64, %s66
    %p70 = scmp.eq.s32.totalorder %s9, 0
    %p71 = por %p69, %p70
    %p72 = scmp.ne.s32.totalorder %s64, %s66
    %p73 = scmp.eq.s32.totalorder %s14, 1
    %p74 = por %p72, %p73
    %p75 = scmp.ne.s32.totalorder %s66, %s67
    %p76 = scmp.eq.s32.totalorder %s14, 0
    %p77 = por %p75, %p76
    %p78 = scmp.ne.s32.totalorder %s66, %s67
    %p79 = scmp.eq.s32.totalorder %s15, 1
    %p80 = por %p78, %p79
    %p82 = scmp.ne.s32.totalorder %s67, %s81
    %p83 = scmp.eq.s32.totalorder %s15, 0
    %p84 = por %p82, %p83
    %s85 = ssub.s32 %s9, %s16
    %p86 = scmp.eq.s32.totalorder %s85, 0
    %s88 = sadd.s32 %s87, 1
    %s89 = scalar_select %p86, %s87, %s88
    %p92 = pneg %p86
    %p93 = scmp.eq.s32.totalorder %s9, 1
    %p94 = por %p92, %p93
    %p95 = scmp.ne.s32.totalorder %s87, %s90
    %p96 = scmp.eq.s32.totalorder %s9, 0
    %p97 = por %p95, %p96
    %p98 = scmp.ne.s32.totalorder %s87, %s90
    %p99 = scmp.eq.s32.totalorder %s14, 1
    %p100 = por %p98, %p99
    %p101 = scmp.ne.s32.totalorder %s90, %s91
    %p102 = scmp.eq.s32.totalorder %s14, 0
    %p103 = por %p101, %p102
    %p104 = scmp.ne.s32.totalorder %s90, %s91
    %p105 = scmp.eq.s32.totalorder %s15, 1
    %p106 = por %p104, %p105
    %p108 = scmp.ne.s32.totalorder %s91, %s107
    %p109 = scmp.eq.s32.totalorder %s15, 0
    %p110 = por %p108, %p109
    %p111 = scmp.le.s32.totalorder 1, %s9
    %p112 = scmp.lt.s32.totalorder %s9, 3
    %p113 = pnand %p111, %p112
    %p114 = pneg %p113
    // Predicated region
    $region9: #{tpu_custom_call.1} parent=5 // pred_check
      _
    $region10: #{tpu_custom_call.1} parent=5 // pred_check_branch
      %116 = sbr.rel (%p113) target = $region12
    $region11: #{tpu_custom_call.1} parent=5 // pred_region
      %s117 = ssub.s32 %s9, 1
      // Predicated region
      $region13: #{tpu_custom_call.1} parent=11 // pred_check
        %p118 = pneg %p56
      $region14: #{tpu_custom_call.1} parent=11 // pred_check_branch
        %120 = sbr.rel (%p118) target = $region16
      $region15: #{tpu_custom_call.1} parent=11 // pred_region
        _
      $region16: #{tpu_custom_call.1} parent=11 // pred_fallthru
        _
      // Predicated region
      $region17: #{tpu_custom_call.1} parent=11 // pred_check
        %p121 = pneg %p77
      $region18: #{tpu_custom_call.1} parent=11 // pred_check_branch
        %123 = sbr.rel (%p121) target = $region20
      $region19: #{tpu_custom_call.1} parent=11 // pred_region
        _
      $region20: #{tpu_custom_call.1} parent=11 // pred_fallthru
        _
    $region12: #{tpu_custom_call.1} parent=5 // pred_fallthru
      _
    %p124 = scmp.lt.s32.totalorder %s9, 2
    // Predicated region
    $region21: #{tpu_custom_call.1} parent=5 // pred_check
      %p125 = pneg %p124
    $region22: #{tpu_custom_call.1} parent=5 // pred_check_branch
      %127 = sbr.rel (%p125) target = $region24
    $region23: #{tpu_custom_call.1} parent=5 // pred_region
      // Predicated region
      $region25: #{tpu_custom_call.1} parent=23 // pred_check
        %p128 = pneg %p29
      $region26: #{tpu_custom_call.1} parent=23 // pred_check_branch
        %130 = sbr.rel (%p128) target = $region28
      $region27: #{tpu_custom_call.1} parent=23 // pred_region
        %s131 = smul.u32 8, %s9
        %p132 = scmp.lt.s32.totalorder %s131, 15
        %s133 = scalar_select %p132, %s131, 15
        %s134 = smul.addr %s133, 8
        %s135 = scalar_lea.vmem %s0, %s134
        %s136 = smul.u32 8, %s9
      $region28: #{tpu_custom_call.1} parent=23 // pred_fallthru
        _
    $region24: #{tpu_custom_call.1} parent=5 // pred_fallthru
      _
    %p137 = scmp.le.s32.totalorder 1, %s9
    %p138 = scmp.lt.s32.totalorder %s9, 3
    %p139 = pnand %p137, %p138
    %p140 = pneg %p139
    // Predicated region
    $region29: #{tpu_custom_call.1} parent=5 // pred_check
      _
    $region30: #{tpu_custom_call.1} parent=5 // pred_check_branch
      %142 = sbr.rel (%p139) target = $region32
    $region31: #{tpu_custom_call.1} parent=5 // pred_region
      %s143 = ssub.s32 %s9, 1
      %s144 = smul.u32 8, %s14
      %p145 = scmp.lt.s32.totalorder %s144, 15
      %s146 = scalar_select %p145, %s144, 15
      %s147 = smul.addr %s146, 8
      %s148 = scalar_lea.vmem %s0, %s147
      %p149 = pneg %p35
      %p150 = pneg %p32
      %p151 = pneg %p56
      %p152 = pneg %p53
      %p153 = pneg %p77
      %p154 = pneg %p74
      %p155 = pneg %p103
      %p156 = pneg %p100
      %s157 = smul.u32 8, %s14
      %p158 = scmp.lt.s32.totalorder %s157, 15
      %s159 = scalar_select %p158, %s157, 15
      %s160 = smul.addr %s159, 8
      %s161 = scalar_lea.vmem %s3, %s160
      %s162 = smul.u32 8, %s14
      %p163 = scmp.lt.s32.totalorder %s162, 15
      %s164 = scalar_select %p163, %s162, 15
      %s165 = smul.addr %s164, 8
      %s166 = scalar_lea.vmem %s0, %s165
      %s167 = smul.u32 8, %s14
      %s168 = smul.u32 8, %s14
      %p169 = scmp.lt.s32.totalorder %s168, 15
      %s170 = scalar_select %p169, %s168, 15
      %s171 = smul.addr %s170, 8
      %s172 = scalar_lea.vmem %s3, %s171
      %s173 = smul.u32 8, %s14
      %v174 = vld [vmem:[%s166] sm:$0xff]
      %v175 = vld [vmem:[%s166 + $0x8] sm:$0xff]
      %v176 = vld [vmem:[%s166 + $0x10] sm:$0xff]
      %v177 = vld [vmem:[%s166 + $0x18] sm:$0xff]
      %v178 = vld [vmem:[%s166 + $0x20] sm:$0xff]
      %v179 = vld [vmem:[%s166 + $0x28] sm:$0xff]
      %v180 = vld [vmem:[%s166 + $0x30] sm:$0xff]
      %v181 = vld [vmem:[%s166 + $0x38] sm:$0xff]
      %v182 = vld [vmem:[%s1] sm:$0xff]
      %v183 = vld [vmem:[%s2] sm:$0x1]
      %v185 = vperm.slane %v183, 0
      %188 = vset.pattern.permute.xlu0 0
      %189 = vperm.xlu0 %188, %v174
      %v190 = vpop.permute.xlu0 %189
      %193 = vset.pattern.permute.xlu0 0
      %194 = vperm.xlu0 %193, %v175
      %v195 = vpop.permute.xlu0 %194
      %198 = vset.pattern.permute.xlu0 0
      %199 = vperm.xlu0 %198, %v176
      %v200 = vpop.permute.xlu0 %199
      %203 = vset.pattern.permute.xlu0 0
      %204 = vperm.xlu0 %203, %v177
      %v205 = vpop.permute.xlu0 %204
      %208 = vset.pattern.permute.xlu0 0
      %209 = vperm.xlu0 %208, %v178
      %v210 = vpop.permute.xlu0 %209
      %213 = vset.pattern.permute.xlu0 0
      %214 = vperm.xlu0 %213, %v179
      %v215 = vpop.permute.xlu0 %214
      %218 = vset.pattern.permute.xlu0 0
      %219 = vperm.xlu0 %218, %v180
      %v220 = vpop.permute.xlu0 %219
      %223 = vset.pattern.permute.xlu0 0
      %224 = vperm.xlu0 %223, %v181
      %v225 = vpop.permute.xlu0 %224
      %v227 = vperm.slane %v182, 0
      %v228 = vmul.f32 %v190, %v227
      %v229 = vmul.f32 %v195, %v227
      %v230 = vmul.f32 %v200, %v227
      %v231 = vmul.f32 %v205, %v227
      %v232 = vmul.f32 %v210, %v227
      %v233 = vmul.f32 %v215, %v227
      %v234 = vmul.f32 %v220, %v227
      %v235 = vmul.f32 %v225, %v227
      %v236 = vadd.f32 %v185, %v228
      %v237 = vadd.f32 %v185, %v229
      %v238 = vadd.f32 %v185, %v230
      %v239 = vadd.f32 %v185, %v231
      %v240 = vadd.f32 %v185, %v232
      %v241 = vadd.f32 %v185, %v233
      %v242 = vadd.f32 %v185, %v234
      %v243 = vadd.f32 %v185, %v235
      %244 = vset.pattern.permute.xlu0 1
      %245 = vperm.xlu0 %244, %v174
      %v246 = vpop.permute.xlu0 %245
      %248 = vset.pattern.permute.xlu0 1
      %249 = vperm.xlu0 %248, %v175
      %v250 = vpop.permute.xlu0 %249
      %252 = vset.pattern.permute.xlu0 1
      %253 = vperm.xlu0 %252, %v176
      %v254 = vpop.permute.xlu0 %253
      %256 = vset.pattern.permute.xlu0 1
      %257 = vperm.xlu0 %256, %v177
      %v258 = vpop.permute.xlu0 %257
      %260 = vset.pattern.permute.xlu0 1
      %261 = vperm.xlu0 %260, %v178
      %v262 = vpop.permute.xlu0 %261
      %264 = vset.pattern.permute.xlu0 1
      %265 = vperm.xlu0 %264, %v179
      %v266 = vpop.permute.xlu0 %265
      %268 = vset.pattern.permute.xlu0 1
      %269 = vperm.xlu0 %268, %v180
      %v270 = vpop.permute.xlu0 %269
      %272 = vset.pattern.permute.xlu0 1
      %273 = vperm.xlu0 %272, %v181
      %v274 = vpop.permute.xlu0 %273
      %v276 = vperm.slane %v182, 1
      %v277 = vmul.f32 %v246, %v276
      %v278 = vmul.f32 %v250, %v276
      %v279 = vmul.f32 %v254, %v276
      %v280 = vmul.f32 %v258, %v276
      %v281 = vmul.f32 %v262, %v276
      %v282 = vmul.f32 %v266, %v276
      %v283 = vmul.f32 %v270, %v276
      %v284 = vmul.f32 %v274, %v276
      %v285 = vadd.f32 %v236, %v277
      %v286 = vadd.f32 %v237, %v278
      %v287 = vadd.f32 %v238, %v279
      %v288 = vadd.f32 %v239, %v280
      %v289 = vadd.f32 %v240, %v281
      %v290 = vadd.f32 %v241, %v282
      %v291 = vadd.f32 %v242, %v283
      %v292 = vadd.f32 %v243, %v284
      %293 = vset.pattern.permute.xlu0 2
      %294 = vperm.xlu0 %293, %v174
      %v295 = vpop.permute.xlu0 %294
      %297 = vset.pattern.permute.xlu0 2
      %298 = vperm.xlu0 %297, %v175
      %v299 = vpop.permute.xlu0 %298
      %301 = vset.pattern.permute.xlu0 2
      %302 = vperm.xlu0 %301, %v176
      %v303 = vpop.permute.xlu0 %302
      %305 = vset.pattern.permute.xlu0 2
      %306 = vperm.xlu0 %305, %v177
      %v307 = vpop.permute.xlu0 %306
      %309 = vset.pattern.permute.xlu0 2
      %310 = vperm.xlu0 %309, %v178
      %v311 = vpop.permute.xlu0 %310
      %313 = vset.pattern.permute.xlu0 2
      %314 = vperm.xlu0 %313, %v179
      %v315 = vpop.permute.xlu0 %314
      %317 = vset.pattern.permute.xlu0 2
      %318 = vperm.xlu0 %317, %v180
      %v319 = vpop.permute.xlu0 %318
      %321 = vset.pattern.permute.xlu0 2
      %322 = vperm.xlu0 %321, %v181
      %v323 = vpop.permute.xlu0 %322
      %v325 = vperm.slane %v182, 2
      %v326 = vmul.f32 %v295, %v325
      %v327 = vmul.f32 %v299, %v325
      %v328 = vmul.f32 %v303, %v325
      %v329 = vmul.f32 %v307, %v325
      %v330 = vmul.f32 %v311, %v325
      %v331 = vmul.f32 %v315, %v325
      %v332 = vmul.f32 %v319, %v325
      %v333 = vmul.f32 %v323, %v325
      %v334 = vadd.f32 %v285, %v326
      %v335 = vadd.f32 %v286, %v327
      %v336 = vadd.f32 %v287, %v328
      %v337 = vadd.f32 %v288, %v329
      %v338 = vadd.f32 %v289, %v330
      %v339 = vadd.f32 %v290, %v331
      %v340 = vadd.f32 %v291, %v332
      %v341 = vadd.f32 %v292, %v333
      %342 = vset.pattern.permute.xlu0 3
      %343 = vperm.xlu0 %342, %v174
      %v344 = vpop.permute.xlu0 %343
      %346 = vset.pattern.permute.xlu0 3
      %347 = vperm.xlu0 %346, %v175
      %v348 = vpop.permute.xlu0 %347
      %350 = vset.pattern.permute.xlu0 3
      %351 = vperm.xlu0 %350, %v176
      %v352 = vpop.permute.xlu0 %351
      %354 = vset.pattern.permute.xlu0 3
      %355 = vperm.xlu0 %354, %v177
      %v356 = vpop.permute.xlu0 %355
      %358 = vset.pattern.permute.xlu0 3
      %359 = vperm.xlu0 %358, %v178
      %v360 = vpop.permute.xlu0 %359
      %362 = vset.pattern.permute.xlu0 3
      %363 = vperm.xlu0 %362, %v179
      %v364 = vpop.permute.xlu0 %363
      %366 = vset.pattern.permute.xlu0 3
      %367 = vperm.xlu0 %366, %v180
      %v368 = vpop.permute.xlu0 %367
      %370 = vset.pattern.permute.xlu0 3
      %371 = vperm.xlu0 %370, %v181
      %v372 = vpop.permute.xlu0 %371
      %v374 = vperm.slane %v182, 3
      %v375 = vmul.f32 %v344, %v374
      %v376 = vmul.f32 %v348, %v374
      %v377 = vmul.f32 %v352, %v374
      %v378 = vmul.f32 %v356, %v374
      %v379 = vmul.f32 %v360, %v374
      %v380 = vmul.f32 %v364, %v374
      %v381 = vmul.f32 %v368, %v374
      %v382 = vmul.f32 %v372, %v374
      %v383 = vadd.f32 %v334, %v375
      %v384 = vadd.f32 %v335, %v376
      %v385 = vadd.f32 %v336, %v377
      %v386 = vadd.f32 %v337, %v378
      %v387 = vadd.f32 %v338, %v379
      %v388 = vadd.f32 %v339, %v380
      %v389 = vadd.f32 %v340, %v381
      %v390 = vadd.f32 %v341, %v382
      %391 = vset.pattern.permute.xlu0 4
      %392 = vperm.xlu0 %391, %v174
      %v393 = vpop.permute.xlu0 %392
      %395 = vset.pattern.permute.xlu0 4
      %396 = vperm.xlu0 %395, %v175
      %v397 = vpop.permute.xlu0 %396
      %399 = vset.pattern.permute.xlu0 4
      %400 = vperm.xlu0 %399, %v176
      %v401 = vpop.permute.xlu0 %400
      %403 = vset.pattern.permute.xlu0 4
      %404 = vperm.xlu0 %403, %v177
      %v405 = vpop.permute.xlu0 %404
      %407 = vset.pattern.permute.xlu0 4
      %408 = vperm.xlu0 %407, %v178
      %v409 = vpop.permute.xlu0 %408
      %411 = vset.pattern.permute.xlu0 4
      %412 = vperm.xlu0 %411, %v179
      %v413 = vpop.permute.xlu0 %412
      %415 = vset.pattern.permute.xlu0 4
      %416 = vperm.xlu0 %415, %v180
      %v417 = vpop.permute.xlu0 %416
      %419 = vset.pattern.permute.xlu0 4
      %420 = vperm.xlu0 %419, %v181
      %v421 = vpop.permute.xlu0 %420
      %v423 = vperm.slane %v182, 4
      %v424 = vmul.f32 %v393, %v423
      %v425 = vmul.f32 %v397, %v423
      %v426 = vmul.f32 %v401, %v423
      %v427 = vmul.f32 %v405, %v423
      %v428 = vmul.f32 %v409, %v423
      %v429 = vmul.f32 %v413, %v423
      %v430 = vmul.f32 %v417, %v423
      %v431 = vmul.f32 %v421, %v423
      %v432 = vadd.f32 %v383, %v424
      %v433 = vadd.f32 %v384, %v425
      %v434 = vadd.f32 %v385, %v426
      %v435 = vadd.f32 %v386, %v427
      %v436 = vadd.f32 %v387, %v428
      %v437 = vadd.f32 %v388, %v429
      %v438 = vadd.f32 %v389, %v430
      %v439 = vadd.f32 %v390, %v431
      %440 = vset.pattern.permute.xlu0 5
      %441 = vperm.xlu0 %440, %v174
      %v442 = vpop.permute.xlu0 %441
      %444 = vset.pattern.permute.xlu0 5
      %445 = vperm.xlu0 %444, %v175
      %v446 = vpop.permute.xlu0 %445
      %448 = vset.pattern.permute.xlu0 5
      %449 = vperm.xlu0 %448, %v176
      %v450 = vpop.permute.xlu0 %449
      %452 = vset.pattern.permute.xlu0 5
      %453 = vperm.xlu0 %452, %v177
      %v454 = vpop.permute.xlu0 %453
      %456 = vset.pattern.permute.xlu0 5
      %457 = vperm.xlu0 %456, %v178
      %v458 = vpop.permute.xlu0 %457
      %460 = vset.pattern.permute.xlu0 5
      %461 = vperm.xlu0 %460, %v179
      %v462 = vpop.permute.xlu0 %461
      %464 = vset.pattern.permute.xlu0 5
      %465 = vperm.xlu0 %464, %v180
      %v466 = vpop.permute.xlu0 %465
      %468 = vset.pattern.permute.xlu0 5
      %469 = vperm.xlu0 %468, %v181
      %v470 = vpop.permute.xlu0 %469
      %v472 = vperm.slane %v182, 5
      %v473 = vmul.f32 %v442, %v472
      %v474 = vmul.f32 %v446, %v472
      %v475 = vmul.f32 %v450, %v472
      %v476 = vmul.f32 %v454, %v472
      %v477 = vmul.f32 %v458, %v472
      %v478 = vmul.f32 %v462, %v472
      %v479 = vmul.f32 %v466, %v472
      %v480 = vmul.f32 %v470, %v472
      %v481 = vadd.f32 %v432, %v473
      %v482 = vadd.f32 %v433, %v474
      %v483 = vadd.f32 %v434, %v475
      %v484 = vadd.f32 %v435, %v476
      %v485 = vadd.f32 %v436, %v477
      %v486 = vadd.f32 %v437, %v478
      %v487 = vadd.f32 %v438, %v479
      %v488 = vadd.f32 %v439, %v480
      %489 = vset.pattern.permute.xlu0 6
      %490 = vperm.xlu0 %489, %v174
      %v491 = vpop.permute.xlu0 %490
      %493 = vset.pattern.permute.xlu0 6
      %494 = vperm.xlu0 %493, %v175
      %v495 = vpop.permute.xlu0 %494
      %497 = vset.pattern.permute.xlu0 6
      %498 = vperm.xlu0 %497, %v176
      %v499 = vpop.permute.xlu0 %498
      %501 = vset.pattern.permute.xlu0 6
      %502 = vperm.xlu0 %501, %v177
      %v503 = vpop.permute.xlu0 %502
      %505 = vset.pattern.permute.xlu0 6
      %506 = vperm.xlu0 %505, %v178
      %v507 = vpop.permute.xlu0 %506
      %509 = vset.pattern.permute.xlu0 6
      %510 = vperm.xlu0 %509, %v179
      %v511 = vpop.permute.xlu0 %510
      %513 = vset.pattern.permute.xlu0 6
      %514 = vperm.xlu0 %513, %v180
      %v515 = vpop.permute.xlu0 %514
      %517 = vset.pattern.permute.xlu0 6
      %518 = vperm.xlu0 %517, %v181
      %v519 = vpop.permute.xlu0 %518
      %v521 = vperm.slane %v182, 6
      %v522 = vmul.f32 %v491, %v521
      %v523 = vmul.f32 %v495, %v521
      %v524 = vmul.f32 %v499, %v521
      %v525 = vmul.f32 %v503, %v521
      %v526 = vmul.f32 %v507, %v521
      %v527 = vmul.f32 %v511, %v521
      %v528 = vmul.f32 %v515, %v521
      %v529 = vmul.f32 %v519, %v521
      %v530 = vadd.f32 %v481, %v522
      %v531 = vadd.f32 %v482, %v523
      %v532 = vadd.f32 %v483, %v524
      %v533 = vadd.f32 %v484, %v525
      %v534 = vadd.f32 %v485, %v526
      %v535 = vadd.f32 %v486, %v527
      %v536 = vadd.f32 %v487, %v528
      %v537 = vadd.f32 %v488, %v529
      %538 = vset.pattern.permute.xlu0 7
      %539 = vperm.xlu0 %538, %v174
      %v540 = vpop.permute.xlu0 %539
      %542 = vset.pattern.permute.xlu0 7
      %543 = vperm.xlu0 %542, %v175
      %v544 = vpop.permute.xlu0 %543
      %546 = vset.pattern.permute.xlu0 7
      %547 = vperm.xlu0 %546, %v176
      %v548 = vpop.permute.xlu0 %547
      %550 = vset.pattern.permute.xlu0 7
      %551 = vperm.xlu0 %550, %v177
      %v552 = vpop.permute.xlu0 %551
      %554 = vset.pattern.permute.xlu0 7
      %555 = vperm.xlu0 %554, %v178
      %v556 = vpop.permute.xlu0 %555
      %558 = vset.pattern.permute.xlu0 7
      %559 = vperm.xlu0 %558, %v179
      %v560 = vpop.permute.xlu0 %559
      %562 = vset.pattern.permute.xlu0 7
      %563 = vperm.xlu0 %562, %v180
      %v564 = vpop.permute.xlu0 %563
      %566 = vset.pattern.permute.xlu0 7
      %567 = vperm.xlu0 %566, %v181
      %v568 = vpop.permute.xlu0 %567
      %v570 = vperm.slane %v182, 7
      %v571 = vmul.f32 %v540, %v570
      %v572 = vmul.f32 %v544, %v570
      %v573 = vmul.f32 %v548, %v570
      %v574 = vmul.f32 %v552, %v570
      %v575 = vmul.f32 %v556, %v570
      %v576 = vmul.f32 %v560, %v570
      %v577 = vmul.f32 %v564, %v570
      %v578 = vmul.f32 %v568, %v570
      %v579 = vadd.f32 %v530, %v571
      %v580 = vadd.f32 %v531, %v572
      %v581 = vadd.f32 %v532, %v573
      %v582 = vadd.f32 %v533, %v574
      %v583 = vadd.f32 %v534, %v575
      %v584 = vadd.f32 %v535, %v576
      %v585 = vadd.f32 %v536, %v577
      %v586 = vadd.f32 %v537, %v578
      %v587 = vround.ne.pseudo %v579
      %v588 = vround.ne.pseudo %v580
      %v589 = vround.ne.pseudo %v581
      %v590 = vround.ne.pseudo %v582
      %v591 = vround.ne.pseudo %v583
      %v592 = vround.ne.pseudo %v584
      %v593 = vround.ne.pseudo %v585
      %v594 = vround.ne.pseudo %v586
      %v595 = vsub.f32 %v579, %v587
      %v596 = vsub.f32 %v580, %v588
      %v597 = vsub.f32 %v581, %v589
      %v598 = vsub.f32 %v582, %v590
      %v599 = vsub.f32 %v583, %v591
      %v600 = vsub.f32 %v584, %v592
      %v601 = vsub.f32 %v585, %v593
      %v602 = vsub.f32 %v586, %v594
      %v603 = vmul.f32 %v595, 2.0
      %v604 = vmul.f32 %v596, 2.0
      %v605 = vmul.f32 %v597, 2.0
      %v606 = vmul.f32 %v598, 2.0
      %v607 = vmul.f32 %v599, 2.0
      %v608 = vmul.f32 %v600, 2.0
      %v609 = vmul.f32 %v601, 2.0
      %v610 = vmul.f32 %v602, 2.0
      %v611 = vround.ne.pseudo %v603
      %v612 = vround.ne.pseudo %v604
      %v613 = vround.ne.pseudo %v605
      %v614 = vround.ne.pseudo %v606
      %v615 = vround.ne.pseudo %v607
      %v616 = vround.ne.pseudo %v608
      %v617 = vround.ne.pseudo %v609
      %v618 = vround.ne.pseudo %v610
      %v619 = vmul.f32 %v611, 0.5
      %v620 = vmul.f32 %v612, 0.5
      %v621 = vmul.f32 %v613, 0.5
      %v622 = vmul.f32 %v614, 0.5
      %v623 = vmul.f32 %v615, 0.5
      %v624 = vmul.f32 %v616, 0.5
      %v625 = vmul.f32 %v617, 0.5
      %v626 = vmul.f32 %v618, 0.5
      %v627 = vsub.f32 %v595, %v619
      %v628 = vsub.f32 %v596, %v620
      %v629 = vsub.f32 %v597, %v621
      %v630 = vsub.f32 %v598, %v622
      %v631 = vsub.f32 %v599, %v623
      %v632 = vsub.f32 %v600, %v624
      %v633 = vsub.f32 %v601, %v625
      %v634 = vsub.f32 %v602, %v626
      %v635 = vmul.f32 %v627, 6.2831855
      %v636 = vmul.f32 %v628, 6.2831855
      %v637 = vmul.f32 %v629, 6.2831855
      %v638 = vmul.f32 %v630, 6.2831855
      %v639 = vmul.f32 %v631, 6.2831855
      %v640 = vmul.f32 %v632, 6.2831855
      %v641 = vmul.f32 %v633, 6.2831855
      %v642 = vmul.f32 %v634, 6.2831855
      %v643 = vmul.f32 %v635, %v635
      %v644 = vmul.f32 %v636, %v636
      %v645 = vmul.f32 %v637, %v637
      %v646 = vmul.f32 %v638, %v638
      %v647 = vmul.f32 %v639, %v639
      %v648 = vmul.f32 %v640, %v640
      %v649 = vmul.f32 %v641, %v641
      %v650 = vmul.f32 %v642, %v642
      %v651 = vmul.f32 %v643, -2.5052108e-08
      %v652 = vmul.f32 %v644, -2.5052108e-08
      %v653 = vmul.f32 %v645, -2.5052108e-08
      %v654 = vmul.f32 %v646, -2.5052108e-08
      %v655 = vmul.f32 %v647, -2.5052108e-08
      %v656 = vmul.f32 %v648, -2.5052108e-08
      %v657 = vmul.f32 %v649, -2.5052108e-08
      %v658 = vmul.f32 %v650, -2.5052108e-08
      %v659 = vadd.f32 %v651, 2.7557319e-06
      %v660 = vadd.f32 %v652, 2.7557319e-06
      %v661 = vadd.f32 %v653, 2.7557319e-06
      %v662 = vadd.f32 %v654, 2.7557319e-06
      %v663 = vadd.f32 %v655, 2.7557319e-06
      %v664 = vadd.f32 %v656, 2.7557319e-06
      %v665 = vadd.f32 %v657, 2.7557319e-06
      %v666 = vadd.f32 %v658, 2.7557319e-06
      %v667 = vmul.f32 %v643, %v659
      %v668 = vmul.f32 %v644, %v660
      %v669 = vmul.f32 %v645, %v661
      %v670 = vmul.f32 %v646, %v662
      %v671 = vmul.f32 %v647, %v663
      %v672 = vmul.f32 %v648, %v664
      %v673 = vmul.f32 %v649, %v665
      %v674 = vmul.f32 %v650, %v666
      %v675 = vadd.f32 %v667, -0.0001984127
      %v676 = vadd.f32 %v668, -0.0001984127
      %v677 = vadd.f32 %v669, -0.0001984127
      %v678 = vadd.f32 %v670, -0.0001984127
      %v679 = vadd.f32 %v671, -0.0001984127
      %v680 = vadd.f32 %v672, -0.0001984127
      %v681 = vadd.f32 %v673, -0.0001984127
      %v682 = vadd.f32 %v674, -0.0001984127
      %v683 = vmul.f32 %v643, %v675
      %v684 = vmul.f32 %v644, %v676
      %v685 = vmul.f32 %v645, %v677
      %v686 = vmul.f32 %v646, %v678
      %v687 = vmul.f32 %v647, %v679
      %v688 = vmul.f32 %v648, %v680
      %v689 = vmul.f32 %v649, %v681
      %v690 = vmul.f32 %v650, %v682
      %v691 = vadd.f32 %v683, 0.008333334
      %v692 = vadd.f32 %v684, 0.008333334
      %v693 = vadd.f32 %v685, 0.008333334
      %v694 = vadd.f32 %v686, 0.008333334
      %v695 = vadd.f32 %v687, 0.008333334
      %v696 = vadd.f32 %v688, 0.008333334
      %v697 = vadd.f32 %v689, 0.008333334
      %v698 = vadd.f32 %v690, 0.008333334
      %v699 = vmul.f32 %v643, %v691
      %v700 = vmul.f32 %v644, %v692
      %v701 = vmul.f32 %v645, %v693
      %v702 = vmul.f32 %v646, %v694
      %v703 = vmul.f32 %v647, %v695
      %v704 = vmul.f32 %v648, %v696
      %v705 = vmul.f32 %v649, %v697
      %v706 = vmul.f32 %v650, %v698
      %v707 = vadd.f32 %v699, -0.16666667
      %v708 = vadd.f32 %v700, -0.16666667
      %v709 = vadd.f32 %v701, -0.16666667
      %v710 = vadd.f32 %v702, -0.16666667
      %v711 = vadd.f32 %v703, -0.16666667
      %v712 = vadd.f32 %v704, -0.16666667
      %v713 = vadd.f32 %v705, -0.16666667
      %v714 = vadd.f32 %v706, -0.16666667
      %v715 = vmul.f32 %v643, %v707
      %v716 = vmul.f32 %v644, %v708
      %v717 = vmul.f32 %v645, %v709
      %v718 = vmul.f32 %v646, %v710
      %v719 = vmul.f32 %v647, %v711
      %v720 = vmul.f32 %v648, %v712
      %v721 = vmul.f32 %v649, %v713
      %v722 = vmul.f32 %v650, %v714
      %v723 = vadd.f32 %v715, 1.0
      %v724 = vadd.f32 %v716, 1.0
      %v725 = vadd.f32 %v717, 1.0
      %v726 = vadd.f32 %v718, 1.0
      %v727 = vadd.f32 %v719, 1.0
      %v728 = vadd.f32 %v720, 1.0
      %v729 = vadd.f32 %v721, 1.0
      %v730 = vadd.f32 %v722, 1.0
      %v731 = vmul.f32 %v635, %v723
      %v732 = vmul.f32 %v636, %v724
      %v733 = vmul.f32 %v637, %v725
      %v734 = vmul.f32 %v638, %v726
      %v735 = vmul.f32 %v639, %v727
      %v736 = vmul.f32 %v640, %v728
      %v737 = vmul.f32 %v641, %v729
      %v738 = vmul.f32 %v642, %v730
      %v739 = vmul.f32 %v611, 2.0
      %v740 = vmul.f32 %v612, 2.0
      %v741 = vmul.f32 %v613, 2.0
      %v742 = vmul.f32 %v614, 2.0
      %v743 = vmul.f32 %v615, 2.0
      %v744 = vmul.f32 %v616, 2.0
      %v745 = vmul.f32 %v617, 2.0
      %v746 = vmul.f32 %v618, 2.0
      %v747 = vmul.f32 %v739, %v611
      %v748 = vmul.f32 %v740, %v612
      %v749 = vmul.f32 %v741, %v613
      %v750 = vmul.f32 %v742, %v614
      %v751 = vmul.f32 %v743, %v615
      %v752 = vmul.f32 %v744, %v616
      %v753 = vmul.f32 %v745, %v617
      %v754 = vmul.f32 %v746, %v618
      %v755 = vsub.f32 1.0, %v747
      %v756 = vsub.f32 1.0, %v748
      %v757 = vsub.f32 1.0, %v749
      %v758 = vsub.f32 1.0, %v750
      %v759 = vsub.f32 1.0, %v751
      %v760 = vsub.f32 1.0, %v752
      %v761 = vsub.f32 1.0, %v753
      %v762 = vsub.f32 1.0, %v754
      %v763 = vmul.f32 %v755, %v731
      %v764 = vmul.f32 %v756, %v732
      %v765 = vmul.f32 %v757, %v733
      %v766 = vmul.f32 %v758, %v734
      %v767 = vmul.f32 %v759, %v735
      %v768 = vmul.f32 %v760, %v736
      %v769 = vmul.f32 %v761, %v737
      %v770 = vmul.f32 %v762, %v738
      %vm771 = vcmask 261120
      %772 = vst.msk [vmem:[%s172] sm:$0xff] %vm771, %v763
      %773 = vst.msk [vmem:[%s172 + $0x8] sm:$0xff] %vm771, %v764
      %774 = vst.msk [vmem:[%s172 + $0x10] sm:$0xff] %vm771, %v765
      %775 = vst.msk [vmem:[%s172 + $0x18] sm:$0xff] %vm771, %v766
      %776 = vst.msk [vmem:[%s172 + $0x20] sm:$0xff] %vm771, %v767
      %777 = vst.msk [vmem:[%s172 + $0x28] sm:$0xff] %vm771, %v768
      %778 = vst.msk [vmem:[%s172 + $0x30] sm:$0xff] %vm771, %v769
      %779 = vst.msk [vmem:[%s172 + $0x38] sm:$0xff] %vm771, %v770
      %s780 = smul.u32 8, %s14
      %p781 = scmp.lt.s32.totalorder %s780, 15
      %s782 = scalar_select %p781, %s780, 15
      %s783 = smul.addr %s782, 8
      %s784 = scalar_lea.vmem %s3, %s783
      // Predicated region
      $region33: #{tpu_custom_call.1} parent=31 // pred_check
        %p785 = pneg %p100
      $region34: #{tpu_custom_call.1} parent=31 // pred_check_branch
        %787 = sbr.rel (%p785) target = $region36
      $region35: #{tpu_custom_call.1} parent=31 // pred_region
        %s788 = smul.u32 8, %s14
      $region36: #{tpu_custom_call.1} parent=31 // pred_fallthru
        _
    $region32: #{tpu_custom_call.1} parent=5 // pred_fallthru
      _
    %p789 = scmp.le.s32.totalorder 2, %s9
    // Predicated region
    $region37: #{tpu_custom_call.1} parent=5 // pred_check
      %p790 = pneg %p789
    $region38: #{tpu_custom_call.1} parent=5 // pred_check_branch
      %792 = sbr.rel (%p790) target = $region40
    $region39: #{tpu_custom_call.1} parent=5 // pred_region
      %s793 = ssub.s32 %s9, 2
      // Predicated region
      $region41: #{tpu_custom_call.1} parent=39 // pred_check
        %p794 = pneg %p106
      $region42: #{tpu_custom_call.1} parent=39 // pred_check_branch
        %796 = sbr.rel (%p794) target = $region44
      $region43: #{tpu_custom_call.1} parent=39 // pred_region
        %s797 = smul.u32 8, %s15
        %p798 = scmp.lt.s32.totalorder %s797, 15
        %s799 = scalar_select %p798, %s797, 15
        %s800 = smul.addr %s799, 8
        %s801 = scalar_lea.vmem %s3, %s800
      $region44: #{tpu_custom_call.1} parent=39 // pred_fallthru
        _
    $region40: #{tpu_custom_call.1} parent=5 // pred_fallthru
      _
  $region6: #{tpu_custom_call.1} parent=0 // loop_footer
    %s13 = sadd.s32 1, %s9
  $region7: #{tpu_custom_call.1} parent=0 // loop_footer_branch
    %8 = sbr.rel target = $region3
  $region8: #{tpu_custom_call.1} parent=0 // loop_exit
    _

</llo_original>
